<compile_context>
chip_gen: v7x
topology: tpu7x:2x2x1
jax: 0.10.0
libtpu: 0.0.40
codegen_flags: <defaults>
</compile_context>

<pallas_src>
import functools

import jax
import jax.numpy as jnp
from jax.experimental import pallas as pl
from jax.experimental.pallas import tpu as pltpu


def _vq_kernel(z_ref, w_ref, q_ref, err_ref, *, seq_len, tile_t):
    """One (batch, seq-tile) grid step.

    z_ref  : (1, D, tile_t)   input slab in native NCL layout
    w_ref  : (K, D)           full codebook
    q_ref  : (1, D, tile_t)   quantized output slab (same layout as input)
    err_ref: (1, 1, 8, 128)   lane-dense per-tile SSE partial sum (broadcast)
    """
    z = z_ref[0].astype(jnp.float32)          # (D, tile)
    w = w_ref[...].astype(jnp.float32)        # (K, D)
    k = w.shape[0]

    # Squared distances, computed in the (K, tile) orientation so no transpose
    # of the z slab is ever needed.
    z_sq = jnp.sum(z * z, axis=0, keepdims=True)                    # (1, tile)
    w_sq = jnp.sum(w * w, axis=1, keepdims=True)                    # (K, 1)
    cross = jnp.dot(w, z, preferred_element_type=jnp.float32)       # (K, tile)  MXU
    dist = z_sq + w_sq - 2.0 * cross                                # (K, tile)

    # First-occurrence argmin over K (sublane axis), matching torch.argmin.
    # f32 index arithmetic keeps all reductions on the well-supported f32 path.
    min_d = jnp.min(dist, axis=0, keepdims=True)                    # (1, tile)
    k_idx = jax.lax.broadcasted_iota(jnp.int32, dist.shape, 0).astype(jnp.float32)
    idx = jnp.min(jnp.where(dist == min_d, k_idx, jnp.float32(k)),
                  axis=0, keepdims=True)                            # (1, tile)

    # one_hot(idx) @ codebook  ==  exact gather of the selected codebook rows.
    enc = (k_idx == idx).astype(jnp.float32)                        # (K, tile)
    quant = jnp.dot(w.T, enc, preferred_element_type=jnp.float32)   # (D, tile)  MXU

    q_ref[0] = quant.astype(q_ref.dtype)

    # Per-tile SSE partial sum (padded columns masked out of the loss).
    diff = quant - z
    col_sse = jnp.sum(diff * diff, axis=0, keepdims=True)           # (1, tile)
    if seq_len % tile_t != 0:
        t_idx = (pl.program_id(1) * tile_t
                 + jax.lax.broadcasted_iota(jnp.int32, col_sse.shape, 1))
        col_sse = jnp.where(t_idx < seq_len, col_sse, 0.0)
    sse = jnp.sum(col_sse, axis=1, keepdims=True)                   # (1, 1)
    err_ref[0, 0] = jnp.broadcast_to(sse, (8, 128))                 # lane-dense store


def vector_quantizer_forward(z, codebook, commitment_cost=0.25, tile_t=256):
    """z: (B, embedding_dim, T) float32; codebook: (K, embedding_dim) float32."""
    B, D, T = z.shape
    K, D2 = codebook.shape
    assert D == D2, "codebook embedding_dim mismatch"

    if T <= tile_t:
        tile = T                      # single tile spans full T (full-dim block is legal)
    else:
        tile = tile_t
        assert tile % 128 == 0, "tile_t must be a multiple of 128 (lane width)"
    n_t = pl.cdiv(T, tile)
    Tp = n_t * tile
    zp = z if Tp == T else jnp.pad(z, ((0, 0), (0, 0), (0, Tp - T)))

    kernel = functools.partial(_vq_kernel, seq_len=T, tile_t=tile)

    quant_p, err = pl.pallas_call(
        kernel,
        out_shape=(
            jax.ShapeDtypeStruct((B, D, Tp), z.dtype),
            jax.ShapeDtypeStruct((B, n_t, 8, 128), jnp.float32),
        ),
        grid_spec=pltpu.PrefetchScalarGridSpec(
            num_scalar_prefetch=0,
            grid=(B, n_t),
            in_specs=[
                pl.BlockSpec((1, D, tile), lambda b, t: (b, 0, t)),   # z slab (NCL)
                pl.BlockSpec((K, D), lambda b, t: (0, 0)),            # full codebook
            ],
            out_specs=(
                pl.BlockSpec((1, D, tile), lambda b, t: (b, 0, t)),   # quantized slab
                pl.BlockSpec((1, 1, 8, 128), lambda b, t: (b, t, 0, 0)),  # SSE partials
            ),
        ),
        compiler_params=pltpu.CompilerParams(
            dimension_semantics=("parallel", "parallel"),
            vmem_limit_bytes=32 * 1024 * 1024,   # safe on v5e/v6e/v7x; usage is tiny here
        ),
    )(zp, codebook)

    # F.mse_loss(quantized, z): forward value of q_latent + cc * e_latent == (1+cc)*MSE.
    total_sse = jnp.sum(err[:, :, 0, 0])
    mse = total_sse / jnp.float32(B * T * D)
    loss = (1.0 + commitment_cost) * mse

    # Straight-through estimator: forward value equals `quantized`, already in (B, D, T).
    # TODO(synk): if gradients are ever needed, wrap with jax.custom_vjp / stop_gradient
    # to reproduce the detach()-based straight-through and loss-split semantics.
    quantized = quant_p if Tp == T else quant_p[:, :, :T]
    return quantized, loss


def _reference_forward(z, codebook, commitment_cost=0.25):
    # Pure-JAX reference mirroring the PyTorch module, for correctness checks.
    B, D, T = z.shape
    zf = jnp.transpose(z, (0, 2, 1)).reshape(-1, D)
    dist = (jnp.sum(zf ** 2, axis=1, keepdims=True)
            + jnp.sum(codebook ** 2, axis=1)[None, :]
            - 2.0 * zf @ codebook.T)
    idx = jnp.argmin(dist, axis=1)
    quant = codebook[idx]
    mse = jnp.mean((quant - zf) ** 2)
    loss = (1.0 + commitment_cost) * mse
    quant = quant.reshape(B, T, D).transpose(0, 2, 1)
    return quant, loss


def _check(z, codebook):
    quantized, loss = jax.jit(vector_quantizer_forward)(z, codebook)
    jax.block_until_ready((quantized, loss))
    q_ref, loss_ref = _reference_forward(z, codebook)
    assert quantized.shape == z.shape, (quantized.shape, z.shape)
    assert jnp.allclose(quantized, q_ref, atol=1e-5), "quantized mismatch"
    assert jnp.allclose(loss, loss_ref, atol=1e-6), ("loss mismatch", loss, loss_ref)


if __name__ == "__main__":
    num_embeddings = 128   # K
    embedding_dim = 32     # D
    batch, seq = 2, 512    # B, T  -> grid (2, 2) of 256-position tiles

    key = jax.random.PRNGKey(0)
    k_z, k_w, k_z2 = jax.random.split(key, 3)

    # Deterministic parameter init matching nn.Embedding + uniform_(-1/K, 1/K).
    codebook = jax.random.uniform(
        k_w, (num_embeddings, embedding_dim), dtype=jnp.float32,
        minval=-1.0 / num_embeddings, maxval=1.0 / num_embeddings)

    # Main config: T divisible by the tile (no padding path).
    z = jax.random.normal(k_z, (batch, embedding_dim, seq), dtype=jnp.float32)
    _check(z, codebook)

    # Ragged config: exercises pl.cdiv gridding, zero padding and in-kernel masking.
    z_ragged = jax.random.normal(k_z2, (batch, embedding_dim, 200), dtype=jnp.float32)
    quantized_r, loss_r = jax.jit(
        functools.partial(vector_quantizer_forward, tile_t=128))(z_ragged, codebook)
    jax.block_until_ready((quantized_r, loss_r))
    q_ref_r, loss_ref_r = _reference_forward(z_ragged, codebook)
    assert quantized_r.shape == z_ragged.shape
    assert jnp.allclose(quantized_r, q_ref_r, atol=1e-5), "ragged quantized mismatch"
    assert jnp.allclose(loss_r, loss_ref_r, atol=1e-6), "ragged loss mismatch"

    print("KERNEL_OK")
</pallas_src>

<mosaic_0001>
module attributes {stable_mosaic.version = 11 : i64} {
  func.func @_vq_kernel(%arg0: i32, %arg1: i32, %arg2: memref<1x32x256xf32, #tpu.memory_space<vmem>>, %arg3: memref<128x32xf32, #tpu.memory_space<vmem>>, %arg4: memref<1x32x256xf32, #tpu.memory_space<vmem>>, %arg5: memref<1x1x8x128xf32, #tpu.memory_space<vmem>>) attributes {dimension_semantics = [#tpu.dimension_semantics<parallel>, #tpu.dimension_semantics<parallel>], iteration_bounds = array<i64: 2, 2>, scalar_prefetch = 0 : i64, scratch_operands = 0 : i64, tpu.core_type = #tpu.core_type<tc>, window_params = [{transform_indices = @transform_0, window_bounds = array<i64: 1, 32, 256>}, {pipeline_mode = #tpu.pipeline_mode<synchronous>, transform_indices = @transform_1, window_bounds = array<i64: 128, 32>}, {transform_indices = @transform_2, window_bounds = array<i64: 1, 32, 256>}, {transform_indices = @transform_3, window_bounds = array<i64: 1, 1, 8, 128>}]} {
    %c0 = arith.constant 0 : index
    %c0_0 = arith.constant 0 : index
    %c0_1 = arith.constant 0 : index
    %0 = vector.load %arg2[%c0, %c0_0, %c0_1] : memref<1x32x256xf32, #tpu.memory_space<vmem>>, vector<1x32x256xf32>
    %1 = vector.shape_cast %0 : vector<1x32x256xf32> to vector<32x256xf32>
    %c0_2 = arith.constant 0 : index
    %c0_3 = arith.constant 0 : index
    %2 = vector.load %arg3[%c0_2, %c0_3] : memref<128x32xf32, #tpu.memory_space<vmem>>, vector<128x32xf32>
    %3 = arith.mulf %1, %1 : vector<32x256xf32>
    %cst = arith.constant dense<0.000000e+00> : vector<256xf32>
    %4 = vector.multi_reduction <add>, %3, %cst [0] : vector<32x256xf32> to vector<256xf32>
    %5 = vector.shape_cast %4 : vector<256xf32> to vector<1x256xf32>
    %6 = arith.mulf %2, %2 : vector<128x32xf32>
    %cst_4 = arith.constant dense<0.000000e+00> : vector<128xf32>
    %7 = vector.multi_reduction <add>, %6, %cst_4 [1] : vector<128x32xf32> to vector<128xf32>
    %8 = vector.shape_cast %7 : vector<128xf32> to vector<128x1xf32>
    %cst_5 = arith.constant dense<0.000000e+00> : vector<128x256xf32>
    %9 = tpu.matmul %2, %1, %cst_5 {dimension_numbers = #tpu.dot_dimension_numbers<[1], [0], [0], [1], [0, 0, 1, 1], [], []>} : vector<128x32xf32>, vector<32x256xf32>, vector<128x256xf32> -> vector<128x256xf32>
    %10 = vector.broadcast %5 : vector<1x256xf32> to vector<128x256xf32>
    %11 = vector.broadcast %8 : vector<128x1xf32> to vector<128x256xf32>
    %12 = arith.addf %10, %11 : vector<128x256xf32>
    %cst_6 = arith.constant 2.000000e+00 : f32
    %13 = vector.broadcast %cst_6 : f32 to vector<128x256xf32>
    %14 = arith.mulf %13, %9 : vector<128x256xf32>
    %15 = arith.subf %12, %14 : vector<128x256xf32>
    %cst_7 = arith.constant dense<0x7F800000> : vector<256xf32>
    %16 = vector.multi_reduction <minimumf>, %15, %cst_7 [0] : vector<128x256xf32> to vector<256xf32>
    %17 = vector.shape_cast %16 : vector<256xf32> to vector<1x256xf32>
    %18 = tpu.iota {dimensions = array<i32: 0>} : vector<128x256xi32>
    %19 = arith.sitofp %18 : vector<128x256xi32> to vector<128x256xf32>
    %20 = vector.broadcast %17 : vector<1x256xf32> to vector<128x256xf32>
    %21 = arith.cmpf oeq, %15, %20 : vector<128x256xf32>
    %cst_8 = arith.constant 1.280000e+02 : f32
    %22 = vector.broadcast %cst_8 : f32 to vector<128x256xf32>
    %23 = arith.select %21, %19, %22 : vector<128x256xi1>, vector<128x256xf32>
    %cst_9 = arith.constant dense<0x7F800000> : vector<256xf32>
    %24 = vector.multi_reduction <minimumf>, %23, %cst_9 [0] : vector<128x256xf32> to vector<256xf32>
    %25 = vector.shape_cast %24 : vector<256xf32> to vector<1x256xf32>
    %26 = vector.broadcast %25 : vector<1x256xf32> to vector<128x256xf32>
    %27 = arith.cmpf oeq, %19, %26 : vector<128x256xf32>
    %28 = arith.extui %27 : vector<128x256xi1> to vector<128x256xi32>
    %29 = arith.sitofp %28 : vector<128x256xi32> to vector<128x256xf32>
    %30 = tpu.transpose %2, [1, 0] : vector<128x32xf32> -> vector<32x128xf32>
    %cst_10 = arith.constant dense<0.000000e+00> : vector<32x256xf32>
    %31 = tpu.matmul %30, %29, %cst_10 {dimension_numbers = #tpu.dot_dimension_numbers<[1], [0], [0], [1], [0, 0, 1, 1], [], []>} : vector<32x128xf32>, vector<128x256xf32>, vector<32x256xf32> -> vector<32x256xf32>
    %c0_11 = arith.constant 0 : index
    %c0_12 = arith.constant 0 : index
    %c0_13 = arith.constant 0 : index
    %32 = vector.load %arg4[%c0_11, %c0_12, %c0_13] : memref<1x32x256xf32, #tpu.memory_space<vmem>>, vector<1x32x256xf32>
    %33 = vector.shape_cast %32 : vector<1x32x256xf32> to vector<32x256xf32>
    %34 = vector.shape_cast %31 : vector<32x256xf32> to vector<1x32x256xf32>
    tpu.vector_store %arg4[%c0_11, %c0_12, %c0_13], %34 {strides = array<i32>} : memref<1x32x256xf32, #tpu.memory_space<vmem>>, vector<1x32x256xf32>,
    %35 = arith.subf %31, %1 : vector<32x256xf32>
    %36 = arith.mulf %35, %35 : vector<32x256xf32>
    %cst_14 = arith.constant dense<0.000000e+00> : vector<256xf32>
    %37 = vector.multi_reduction <add>, %36, %cst_14 [0] : vector<32x256xf32> to vector<256xf32>
    %38 = vector.shape_cast %37 : vector<256xf32> to vector<1x256xf32>
    %cst_15 = arith.constant dense<0.000000e+00> : vector<1xf32>
    %39 = vector.multi_reduction <add>, %38, %cst_15 [1] : vector<1x256xf32> to vector<1xf32>
    %40 = vector.shape_cast %39 : vector<1xf32> to vector<1x1xf32>
    %41 = vector.shape_cast %40 : vector<1x1xf32> to vector<1x1xf32>
    %42 = vector.broadcast %41 : vector<1x1xf32> to vector<8x128xf32>
    %c0_16 = arith.constant 0 : index
    %c0_17 = arith.constant 0 : index
    %c0_18 = arith.constant 0 : index
    %c0_19 = arith.constant 0 : index
    %43 = vector.load %arg5[%c0_16, %c0_17, %c0_18, %c0_19] : memref<1x1x8x128xf32, #tpu.memory_space<vmem>>, vector<1x1x8x128xf32>
    %44 = vector.shape_cast %43 : vector<1x1x8x128xf32> to vector<8x128xf32>
    %45 = vector.shape_cast %42 : vector<8x128xf32> to vector<1x1x8x128xf32>
    tpu.vector_store %arg5[%c0_16, %c0_17, %c0_18, %c0_19], %45 {strides = array<i32>} : memref<1x1x8x128xf32, #tpu.memory_space<vmem>>, vector<1x1x8x128xf32>,
    return
  }
  func.func @transform_0(%arg0: i32, %arg1: i32) -> (i32, i32, i32) {
    %c0_i32 = arith.constant 0 : i32
    %c0_i32_0 = arith.constant 0 : i32
    return %arg0, %c0_i32, %arg1 : i32, i32, i32
  }
  func.func @transform_1(%arg0: i32, %arg1: i32) -> (i32, i32) {
    %c0_i32 = arith.constant 0 : i32
    %c0_i32_0 = arith.constant 0 : i32
    %c0_i32_1 = arith.constant 0 : i32
    return %c0_i32, %c0_i32_0 : i32, i32
  }
  func.func @transform_2(%arg0: i32, %arg1: i32) -> (i32, i32, i32) {
    %c0_i32 = arith.constant 0 : i32
    %c0_i32_0 = arith.constant 0 : i32
    return %arg0, %c0_i32, %arg1 : i32, i32, i32
  }
  func.func @transform_3(%arg0: i32, %arg1: i32) -> (i32, i32, i32, i32) {
    %c0_i32 = arith.constant 0 : i32
    %c0_i32_0 = arith.constant 0 : i32
    %c0_i32_1 = arith.constant 0 : i32
    return %arg0, %arg1, %c0_i32, %c0_i32_0 : i32, i32, i32, i32
  }
}

</mosaic_0001>

<llo_original>
// kernel: vector_quantizer_forward.1
$region0: #{vector_quantizer_forward.1}
  #allocation0 [shape = 'u32[]', space=smem, size = 0x4, offset = 0x4, fixed_abs, tag = 'smem constant byte address 0x4 - core index']
  #allocation1 [shape = 'u32[144,128]{1,0:T(1,128)}', space=vmem, size = 0x12000, scoped, tag = 'internal scratch']
  %s0 = inlined_call_operand.hbm [shape: f32[2,32,512], index: 0, kind: input, shape index: {}]
  %s1 = inlined_call_operand.vmem [shape: f32[128,32], index: 1, kind: input, shape index: {}]
  %s2 = inlined_call_operand.hbm [shape: f32[2,32,512], index: 2, kind: output, shape index: {0}]
  %s3 = inlined_call_operand.vmem [shape: f32[2,2,8,128], index: 3, kind: output, shape index: {1}]
  %4 = xla_tuple %s2, %s3
  %s5 = sld [smem:[#allocation0]]
  $region53: #{vector_quantizer_forward.1} parent=0
    _
  %s7 = ssub.s32 1, %s5
  %s8 = scalar_select 0, %s7, %s5
  $region1: #{vector_quantizer_forward.1} parent=0
    #allocation2 [shape = 'u8[65536]{0}', space=vmem, size = 0x10000, scoped, tag = 'input window, operand 0']
    #allocation3 [shape = 's32[2]{0}', space=sflag, size = 0x8, scoped, tag = 'scoped memory for vector_quantizer_forward.1']
    #allocation4 [shape = 's32[2]{0}', space=sflag, size = 0x8, scoped, tag = 'scoped memory for vector_quantizer_forward.1']
    #allocation5 [shape = 'u8[65536]{0}', space=vmem, size = 0x10000, scoped, tag = 'output window, operand 0']
    %9 = vsyncpa [#allocation3], 0
    %s10 = scalar_lea.sflag [#allocation3], 1
    %11 = vsyncpa %s10, 0
    %12 = vsyncpa [#allocation4], 0
    %s13 = scalar_lea.sflag [#allocation4], 1
    %14 = vsyncpa %s13, 0
    loop: start=0, step=1, limit=6
    $region2: #{vector_quantizer_forward.1} parent=1 // loop_pre_header
      _
    $region3: #{vector_quantizer_forward.1} parent=1 // loop_header
      %s16 = sphi 0, %s20
      %p17 = scmp.ge.s32.totalorder %s16, 6
      %s23 = sphi 0, %s35
      %s24 = sphi 0, %s31
      %s25 = sphi 0, %s23
      %s26 = sphi 0, %s24
      %s27 = sphi 0, %s25
      %s28 = sphi 0, %s26
      %s40 = sphi 0, %s42
      %s43 = sphi 0, %s40
      %s44 = sphi 0, %s43
      %s60 = sphi 0, %s44
      %s64 = sphi 0, %s64
      %s66 = sphi 0, %s64
      %s67 = sphi 0, %s66
      %s81 = sphi 0, %s67
      %s89 = sphi 0, %s91
      %s92 = sphi 0, %s89
      %s93 = sphi 0, %s92
      %s109 = sphi 0, %s93
      %s117 = sphi 0, %s119
      %s120 = sphi 0, %s117
      %s121 = sphi 0, %s120
      %s137 = sphi 0, %s121
    $region4: #{vector_quantizer_forward.1} parent=1 // loop_header_branch
      %19 = sbr.rel (%p17) target = $region8
    $region5: #{vector_quantizer_forward.1} parent=1 // loop_body
      %s21 = ssub.s32 %s16, 1
      %s22 = ssub.s32 %s16, 2
      %s29 = sadd.s32 1, %s24
      %p30 = scmp.ge.s32.totalorder %s29, 2
      %s31 = scalar_select %p30, 0, %s29
      %s32 = sadd.s32 1, %s23
      %s33 = scalar_select %p30, %s32, %s23
      %p34 = scmp.ge.s32.totalorder %s33, 2
      %s35 = scalar_select %p34, 0, %s33
      %s36 = ssub.s32 %s23, %s35
      %s37 = ssub.s32 %s24, %s31
      %s38 = sor.u32 %s36, %s37
      %p39 = scmp.eq.s32.totalorder %s38, 0
      %s41 = sadd.s32 %s40, 1
      %s42 = scalar_select %p39, %s40, %s41
      %p45 = pneg %p39
      %p46 = scmp.eq.s32.totalorder %s16, 3
      %p47 = por %p45, %p46
      %p48 = scmp.ne.s32.totalorder %s40, %s43
      %p49 = scmp.eq.s32.totalorder %s16, 0
      %p50 = por %p48, %p49
      %p51 = scmp.ne.s32.totalorder %s40, %s43
      %p52 = scmp.eq.s32.totalorder %s21, 3
      %p53 = por %p51, %p52
      %p54 = scmp.ne.s32.totalorder %s43, %s44
      %p55 = scmp.eq.s32.totalorder %s21, 0
      %p56 = por %p54, %p55
      %p57 = scmp.ne.s32.totalorder %s43, %s44
      %p58 = scmp.eq.s32.totalorder %s22, 3
      %p59 = por %p57, %p58
      %p61 = scmp.ne.s32.totalorder %s44, %s60
      %p62 = scmp.eq.s32.totalorder %s22, 0
      %p63 = por %p61, %p62
      %s65 = sadd.s32 %s64, 1
      %p68 = scmp.eq.s32.totalorder %s16, 3
      %p69 = scmp.ne.s32.totalorder %s64, %s66
      %p70 = scmp.eq.s32.totalorder %s16, 0
      %p71 = por %p69, %p70
      %p72 = scmp.ne.s32.totalorder %s64, %s66
      %p73 = scmp.eq.s32.totalorder %s21, 3
      %p74 = por %p72, %p73
      %p75 = scmp.ne.s32.totalorder %s66, %s67
      %p76 = scmp.eq.s32.totalorder %s21, 0
      %p77 = por %p75, %p76
      %p78 = scmp.ne.s32.totalorder %s66, %s67
      %p79 = scmp.eq.s32.totalorder %s22, 3
      %p80 = por %p78, %p79
      %p82 = scmp.ne.s32.totalorder %s67, %s81
      %p83 = scmp.eq.s32.totalorder %s22, 0
      %p84 = por %p82, %p83
      %s85 = ssub.s32 %s23, %s35
      %s86 = ssub.s32 %s24, %s31
      %s87 = sor.u32 %s85, %s86
      %p88 = scmp.eq.s32.totalorder %s87, 0
      %s90 = sadd.s32 %s89, 1
      %s91 = scalar_select %p88, %s89, %s90
      %p94 = pneg %p88
      %p95 = scmp.eq.s32.totalorder %s16, 3
      %p96 = por %p94, %p95
      %p97 = scmp.ne.s32.totalorder %s89, %s92
      %p98 = scmp.eq.s32.totalorder %s16, 0
      %p99 = por %p97, %p98
      %p100 = scmp.ne.s32.totalorder %s89, %s92
      %p101 = scmp.eq.s32.totalorder %s21, 3
      %p102 = por %p100, %p101
      %p103 = scmp.ne.s32.totalorder %s92, %s93
      %p104 = scmp.eq.s32.totalorder %s21, 0
      %p105 = por %p103, %p104
      %p106 = scmp.ne.s32.totalorder %s92, %s93
      %p107 = scmp.eq.s32.totalorder %s22, 3
      %p108 = por %p106, %p107
      %p110 = scmp.ne.s32.totalorder %s93, %s109
      %p111 = scmp.eq.s32.totalorder %s22, 0
      %p112 = por %p110, %p111
      %s113 = ssub.s32 %s23, %s35
      %s114 = ssub.s32 %s24, %s31
      %s115 = sor.u32 %s113, %s114
      %p116 = scmp.eq.s32.totalorder %s115, 0
      %s118 = sadd.s32 %s117, 1
      %s119 = scalar_select %p116, %s117, %s118
      %p122 = pneg %p116
      %p123 = scmp.eq.s32.totalorder %s16, 3
      %p124 = por %p122, %p123
      %p125 = scmp.ne.s32.totalorder %s117, %s120
      %p126 = scmp.eq.s32.totalorder %s16, 0
      %p127 = por %p125, %p126
      %p128 = scmp.ne.s32.totalorder %s117, %s120
      %p129 = scmp.eq.s32.totalorder %s21, 3
      %p130 = por %p128, %p129
      %p131 = scmp.ne.s32.totalorder %s120, %s121
      %p132 = scmp.eq.s32.totalorder %s21, 0
      %p133 = por %p131, %p132
      %p134 = scmp.ne.s32.totalorder %s120, %s121
      %p135 = scmp.eq.s32.totalorder %s22, 3
      %p136 = por %p134, %p135
      %p138 = scmp.ne.s32.totalorder %s121, %s137
      %p139 = scmp.eq.s32.totalorder %s22, 0
      %p140 = por %p138, %p139
      %p141 = scmp.le.s32.totalorder 1, %s16
      %p142 = scmp.lt.s32.totalorder %s16, 5
      %p143 = pnand %p141, %p142
      %p144 = pneg %p143
      // Predicated region
      $region9: #{vector_quantizer_forward.1} parent=5 // pred_check
        _
      $region10: #{vector_quantizer_forward.1} parent=5 // pred_check_branch
        %146 = sbr.rel (%p143) target = $region12
      $region11: #{vector_quantizer_forward.1} parent=5 // pred_region
        %s147 = ssub.s32 %s16, 1
        // Predicated region
        $region13: #{vector_quantizer_forward.1} parent=11 // pred_check
          %p148 = pneg %p77
        $region14: #{vector_quantizer_forward.1} parent=11 // pred_check_branch
          %150 = sbr.rel (%p148) target = $region16
        $region15: #{vector_quantizer_forward.1} parent=11 // pred_region
          _
        $region16: #{vector_quantizer_forward.1} parent=11 // pred_fallthru
          _
      $region12: #{vector_quantizer_forward.1} parent=5 // pred_fallthru
        _
      %p151 = scmp.lt.s32.totalorder %s16, 4
      // Predicated region
      $region17: #{vector_quantizer_forward.1} parent=5 // pred_check
        %p152 = pneg %p151
      $region18: #{vector_quantizer_forward.1} parent=5 // pred_check_branch
        %154 = sbr.rel (%p152) target = $region20
      $region19: #{vector_quantizer_forward.1} parent=5 // pred_region
        // Predicated region
        $region21: #{vector_quantizer_forward.1} parent=19 // pred_check
          %p155 = pneg %p50
        $region22: #{vector_quantizer_forward.1} parent=19 // pred_check_branch
          %157 = sbr.rel (%p155) target = $region24
        $region23: #{vector_quantizer_forward.1} parent=19 // pred_region
          %s158 = sand.u32 %s40, 1
          %s159 = scalar_lea.sflag [#allocation3], %s158
          %s160 = sand.u32 %s40, 1
          %s161 = smul.addr %s160, 64
          %s162 = scalar_lea.vmem [#allocation2], %s161
          %s163 = smul.u32 2, %s24
          %s165 = ssub.s32 1024, 1024
          %166 = vsyncadd %s159, %s165
          %s167 = smul.addr %s23, 16
          %s168 = sadd.s32 %s163, %s167
          %s169 = smul.addr %s168, 128
          %s170 = scalar_lea.hbm %s0, %s169
          %s171 = sshll.u32 %s162, 4
          %s172 = int_to_ptr.vmem [resolvable:$true] %s171
          %177 = dma.hbm_to_vmem [thread:$0]  %s170, 1024, %s172, %s159, 512, 256, 16
        $region24: #{vector_quantizer_forward.1} parent=19 // pred_fallthru
          _
      $region20: #{vector_quantizer_forward.1} parent=5 // pred_fallthru
        _
      %p178 = scmp.le.s32.totalorder 1, %s16
      %p179 = scmp.lt.s32.totalorder %s16, 5
      %p180 = pnand %p178, %p179
      %p181 = pneg %p180
      // Predicated region
      $region25: #{vector_quantizer_forward.1} parent=5 // pred_check
        _
      $region26: #{vector_quantizer_forward.1} parent=5 // pred_check_branch
        %183 = sbr.rel (%p180) target = $region28
      $region27: #{vector_quantizer_forward.1} parent=5 // pred_region
        %s184 = ssub.s32 %s16, 1
        %s185 = sand.u32 %s43, 1
        %s186 = scalar_lea.sflag [#allocation3], %s185
        %s187 = sand.u32 %s43, 1
        %s188 = smul.addr %s187, 64
        %s189 = scalar_lea.vmem [#allocation2], %s188
        // Predicated region
        $region29: #{vector_quantizer_forward.1} parent=27 // pred_check
          %p190 = pneg %p56
        $region30: #{vector_quantizer_forward.1} parent=27 // pred_check_branch
          %192 = sbr.rel (%p190) target = $region32
        $region31: #{vector_quantizer_forward.1} parent=27 // pred_region
          %193 = dma.done %s186, 1024
        $region32: #{vector_quantizer_forward.1} parent=27 // pred_fallthru
          _
        %s194 = sand.u32 %s43, 1
        %s195 = scalar_lea.sflag [#allocation3], %s194
        %s196 = sand.u32 %s43, 1
        %s197 = smul.addr %s196, 64
        %s198 = scalar_lea.vmem [#allocation2], %s197
        %p199 = pneg %p56
        %p200 = pneg %p53
        %p201 = pneg %p77
        %p202 = pneg %p74
        %p203 = pneg %p105
        %p204 = pneg %p102
        %s205 = sand.u32 %s92, 1
        %s206 = scalar_lea.sflag [#allocation4], %s205
        %s207 = sand.u32 %s92, 1
        %s208 = smul.addr %s207, 64
        %s209 = scalar_lea.vmem [#allocation5], %s208
        %p210 = pneg %p133
        %p211 = pneg %p130
        %p212 = scmp.lt.s32.totalorder %s25, 1
        %s213 = scalar_select %p212, %s25, 1
        %p214 = scmp.lt.s32.totalorder %s26, 1
        %s215 = scalar_select %p214, %s26, 1
        %s216 = smul.addr %s213, 2
        %s217 = sadd.s32 %s215, %s216
        %s218 = smul.addr %s217, 8
        %s219 = scalar_lea.vmem %s3, %s218
        %s220 = smul.u32 2, %s26
        %s221 = smul.u32 2, %s26
        %p222 = scmp.lt.s32.totalorder %s25, 1
        %s223 = scalar_select %p222, %s25, 1
        %p224 = scmp.lt.s32.totalorder %s26, 1
        %s225 = scalar_select %p224, %s26, 1
        %s226 = smul.addr %s223, 2
        %s227 = sadd.s32 %s225, %s226
        %s228 = smul.addr %s227, 8
        %s229 = scalar_lea.vmem %s3, %s228
        %v230 = vld [vmem:[%s189] sm:$0xff]
        %v231 = vld [vmem:[%s189 + $0x8] sm:$0xff]
        %v232 = vld [vmem:[%s189 + $0x10] sm:$0xff]
        %v233 = vld [vmem:[%s189 + $0x18] sm:$0xff]
        %v234 = vld [vmem:[%s189 + $0x20] sm:$0xff]
        %v235 = vld [vmem:[%s189 + $0x28] sm:$0xff]
        %v236 = vld [vmem:[%s189 + $0x30] sm:$0xff]
        %v237 = vld [vmem:[%s189 + $0x38] sm:$0xff]
        %v238 = vld [vmem:[%s1] sm:$0xff]
        %v239 = vld [vmem:[%s1 + $0x8] sm:$0xff]
        %v240 = vld [vmem:[%s1 + $0x10] sm:$0xff]
        %v241 = vld [vmem:[%s1 + $0x18] sm:$0xff]
        %v242 = vld [vmem:[%s1 + $0x20] sm:$0xff]
        %v243 = vld [vmem:[%s1 + $0x28] sm:$0xff]
        %v244 = vld [vmem:[%s1 + $0x30] sm:$0xff]
        %v245 = vld [vmem:[%s1 + $0x38] sm:$0xff]
        %v246 = vld [vmem:[%s1 + $0x40] sm:$0xff]
        %v247 = vld [vmem:[%s1 + $0x48] sm:$0xff]
        %v248 = vld [vmem:[%s1 + $0x50] sm:$0xff]
        %v249 = vld [vmem:[%s1 + $0x58] sm:$0xff]
        %v250 = vld [vmem:[%s1 + $0x60] sm:$0xff]
        %v251 = vld [vmem:[%s1 + $0x68] sm:$0xff]
        %v252 = vld [vmem:[%s1 + $0x70] sm:$0xff]
        %v253 = vld [vmem:[%s1 + $0x78] sm:$0xff]
        %v254 = vmul.f32 %v230, %v230
        %v255 = vmul.f32 %v231, %v231
        %v256 = vmul.f32 %v232, %v232
        %v257 = vmul.f32 %v233, %v233
        %v258 = vmul.f32 %v234, %v234
        %v259 = vmul.f32 %v235, %v235
        %v260 = vmul.f32 %v236, %v236
        %v261 = vmul.f32 %v237, %v237
        %v262 = vadd.f32 %v254, %v256
        %v263 = vadd.f32 %v262, %v258
        %v264 = vadd.f32 %v263, %v260
        %v265 = vrot.slane %v264, 4
        %v266 = vadd.f32 %v264, %v265
        %v267 = vrot.slane %v266, 2
        %v268 = vadd.f32 %v266, %v267
        %v269 = vrot.slane %v268, 1
        %v270 = vadd.f32 %v268, %v269
        %v271 = vadd.f32 %v255, %v257
        %v272 = vadd.f32 %v271, %v259
        %v273 = vadd.f32 %v272, %v261
        %v274 = vrot.slane %v273, 4
        %v275 = vadd.f32 %v273, %v274
        %v276 = vrot.slane %v275, 2
        %v277 = vadd.f32 %v275, %v276
        %v278 = vrot.slane %v277, 1
        %v279 = vadd.f32 %v277, %v278
        %v280 = vmul.f32 %v238, %v238
        %v281 = vmul.f32 %v239, %v239
        %v282 = vmul.f32 %v240, %v240
        %v283 = vmul.f32 %v241, %v241
        %v284 = vmul.f32 %v242, %v242
        %v285 = vmul.f32 %v243, %v243
        %v286 = vmul.f32 %v244, %v244
        %v287 = vmul.f32 %v245, %v245
        %v288 = vmul.f32 %v246, %v246
        %v289 = vmul.f32 %v247, %v247
        %v290 = vmul.f32 %v248, %v248
        %v291 = vmul.f32 %v249, %v249
        %v292 = vmul.f32 %v250, %v250
        %v293 = vmul.f32 %v251, %v251
        %v294 = vmul.f32 %v252, %v252
        %v295 = vmul.f32 %v253, %v253
        %vm296 = vcmask 261120
        %v297 = vsel %vm296, %v280, 0.0
        %298 = vadd.xlane.f32.xlu0 %v297
        %v299 = vpop.xlane.xlu0 %298
        %v300 = vsel %vm296, %v281, 0.0
        %301 = vadd.xlane.f32.xlu0 %v300
        %v302 = vpop.xlane.xlu0 %301
        %v303 = vsel %vm296, %v282, 0.0
        %304 = vadd.xlane.f32.xlu0 %v303
        %v305 = vpop.xlane.xlu0 %304
        %v306 = vsel %vm296, %v283, 0.0
        %307 = vadd.xlane.f32.xlu0 %v306
        %v308 = vpop.xlane.xlu0 %307
        %v309 = vsel %vm296, %v284, 0.0
        %310 = vadd.xlane.f32.xlu0 %v309
        %v311 = vpop.xlane.xlu0 %310
        %v312 = vsel %vm296, %v285, 0.0
        %313 = vadd.xlane.f32.xlu0 %v312
        %v314 = vpop.xlane.xlu0 %313
        %v315 = vsel %vm296, %v286, 0.0
        %316 = vadd.xlane.f32.xlu0 %v315
        %v317 = vpop.xlane.xlu0 %316
        %v318 = vsel %vm296, %v287, 0.0
        %319 = vadd.xlane.f32.xlu0 %v318
        %v320 = vpop.xlane.xlu0 %319
        %v321 = vsel %vm296, %v288, 0.0
        %322 = vadd.xlane.f32.xlu0 %v321
        %v323 = vpop.xlane.xlu0 %322
        %v324 = vsel %vm296, %v289, 0.0
        %325 = vadd.xlane.f32.xlu0 %v324
        %v326 = vpop.xlane.xlu0 %325
        %v327 = vsel %vm296, %v290, 0.0
        %328 = vadd.xlane.f32.xlu0 %v327
        %v329 = vpop.xlane.xlu0 %328
        %v330 = vsel %vm296, %v291, 0.0
        %331 = vadd.xlane.f32.xlu0 %v330
        %v332 = vpop.xlane.xlu0 %331
        %v333 = vsel %vm296, %v292, 0.0
        %334 = vadd.xlane.f32.xlu0 %v333
        %v335 = vpop.xlane.xlu0 %334
        %v336 = vsel %vm296, %v293, 0.0
        %337 = vadd.xlane.f32.xlu0 %v336
        %v338 = vpop.xlane.xlu0 %337
        %v339 = vsel %vm296, %v294, 0.0
        %340 = vadd.xlane.f32.xlu0 %v339
        %v341 = vpop.xlane.xlu0 %340
        %v342 = vsel %vm296, %v295, 0.0
        %343 = vadd.xlane.f32.xlu0 %v342
        %v344 = vpop.xlane.xlu0 %343
        %v346 = vsel %vm296, %v238, 0
        %v349 = vsel %vm296, %v239, 0
        %v352 = vsel %vm296, %v240, 0
        %v355 = vsel %vm296, %v241, 0
        %v358 = vsel %vm296, %v242, 0
        %v361 = vsel %vm296, %v243, 0
        %v364 = vsel %vm296, %v244, 0
        %v367 = vsel %vm296, %v245, 0
        %v370 = vsel %vm296, %v246, 0
        %v373 = vsel %vm296, %v247, 0
        %v376 = vsel %vm296, %v248, 0
        %v379 = vsel %vm296, %v249, 0
        %v382 = vsel %vm296, %v250, 0
        %v385 = vsel %vm296, %v251, 0
        %v388 = vsel %vm296, %v252, 0
        %v391 = vsel %vm296, %v253, 0
        %393 = vmatprep.subr.mxu0 %v231
        %394 = vmatpush1.msra.mxu0 %v230
        %395 = vmatprep.subr.mxu0 %v233
        %396 = vmatpush1.msra.mxu0 %v232
        %397 = vmatprep.subr.mxu0 %v235
        %398 = vmatpush1.msra.mxu0 %v234
        %399 = vmatprep.subr.mxu0 %v237
        %400 = vmatpush1.msra.mxu0 %v236
        %401 = vmatprep.subr.mxu0 0.0
        %402 = vmatpush1.msra.mxu0 0.0
        %403 = vmatprep.subr.mxu0 0.0
        %404 = vmatpush1.msra.mxu0 0.0
        %405 = vmatprep.subr.mxu0 0.0
        %406 = vmatpush1.msra.mxu0 0.0
        %407 = vmatprep.subr.mxu0 0.0
        %408 = vmatpush1.msra.mxu0 0.0
        %409 = vmatprep.subr.mxu0 0.0
        %410 = vmatpush1.msra.mxu0 0.0
        %411 = vmatprep.subr.mxu0 0.0
        %412 = vmatpush1.msra.mxu0 0.0
        %413 = vmatprep.subr.mxu0 0.0
        %414 = vmatpush1.msra.mxu0 0.0
        %415 = vmatprep.subr.mxu0 0.0
        %416 = vmatpush1.msra.mxu0 0.0
        %417 = vmatprep.subr.mxu0 0.0
        %418 = vmatpush1.msra.mxu0 0.0
        %419 = vmatprep.subr.mxu0 0.0
        %420 = vmatpush1.msra.mxu0 0.0
        %421 = vmatprep.subr.mxu0 0.0
        %422 = vmatpush1.msra.mxu0 0.0
        %423 = vmatprep.subr.mxu0 0.0
        %424 = vmatpush1.msra.mxu0 0.0
        %425 = vmatprep.subr.mxu0 0.0
        %426 = vmatpush1.msra.mxu0 0.0
        %427 = vmatprep.subr.mxu0 0.0
        %428 = vmatpush1.msra.mxu0 0.0
        %429 = vmatprep.subr.mxu0 0.0
        %430 = vmatpush1.msra.mxu0 0.0
        %431 = vmatprep.subr.mxu0 0.0
        %432 = vmatpush1.msra.mxu0 0.0
        %433 = vmatprep.subr.mxu0 0.0
        %434 = vmatpush1.msra.mxu0 0.0
        %435 = vmatprep.subr.mxu0 0.0
        %436 = vmatpush1.msra.mxu0 0.0
        %437 = vmatprep.subr.mxu0 0.0
        %438 = vmatpush1.msra.mxu0 0.0
        %439 = vmatprep.subr.mxu0 0.0
        %440 = vmatpush1.msra.mxu0 0.0
        %441 = vmatprep.subr.mxu0 0.0
        %442 = vmatpush1.msra.mxu0 0.0
        %443 = vmatprep.subr.mxu0 0.0
        %444 = vmatpush1.msra.mxu0 0.0
        %445 = vmatprep.subr.mxu0 0.0
        %446 = vmatpush1.msra.mxu0 0.0
        %447 = vmatprep.subr.mxu0 0.0
        %448 = vmatpush1.msra.mxu0 0.0
        %449 = vmatprep.subr.mxu0 0.0
        %450 = vmatpush1.msra.mxu0 0.0
        %451 = vmatprep.subr.mxu0 0.0
        %452 = vmatpush1.msra.mxu0 0.0
        %453 = vmatprep.subr.mxu0 0.0
        %454 = vmatpush1.msra.mxu0 0.0
        %455 = vmatprep.subr.mxu0 0.0
        %456 = vmatpush1.msra.mxu0 0.0
        %457 = vmatprep.mubr.f32.mxu0 0.0
        %458 = vmatmul.mubr.f32.gmra.mrb[0].mxu0 %v346
        %v459 = vpop.f32.mrb[0].mxu0
        %v460 = vadd.f32 0.0, %v459
        %v461 = vpop.f32.mrb[0].mxu0
        %v462 = vadd.f32 0.0, %v461
        %463 = vmatprep.mubr.f32.mxu0 0.0
        %464 = vmatmul.mubr.f32.gmra.mrb[0].mxu0 %v349
        %v465 = vpop.f32.mrb[0].mxu0
        %v466 = vadd.f32 0.0, %v465
        %v467 = vpop.f32.mrb[0].mxu0
        %v468 = vadd.f32 0.0, %v467
        %469 = vmatprep.mubr.f32.mxu0 0.0
        %470 = vmatmul.mubr.f32.gmra.mrb[0].mxu0 %v352
        %v471 = vpop.f32.mrb[0].mxu0
        %v472 = vadd.f32 0.0, %v471
        %v473 = vpop.f32.mrb[0].mxu0
        %v474 = vadd.f32 0.0, %v473
        %475 = vmatprep.mubr.f32.mxu0 0.0
        %476 = vmatmul.mubr.f32.gmra.mrb[0].mxu0 %v355
        %v477 = vpop.f32.mrb[0].mxu0
        %v478 = vadd.f32 0.0, %v477
        %v479 = vpop.f32.mrb[0].mxu0
        %v480 = vadd.f32 0.0, %v479
        %481 = vmatprep.mubr.f32.mxu0 0.0
        %482 = vmatmul.mubr.f32.gmra.mrb[0].mxu0 %v358
        %v483 = vpop.f32.mrb[0].mxu0
        %v484 = vadd.f32 0.0, %v483
        %v485 = vpop.f32.mrb[0].mxu0
        %v486 = vadd.f32 0.0, %v485
        %487 = vmatprep.mubr.f32.mxu0 0.0
        %488 = vmatmul.mubr.f32.gmra.mrb[0].mxu0 %v361
        %v489 = vpop.f32.mrb[0].mxu0
        %v490 = vadd.f32 0.0, %v489
        %v491 = vpop.f32.mrb[0].mxu0
        %v492 = vadd.f32 0.0, %v491
        %493 = vmatprep.mubr.f32.mxu0 0.0
        %494 = vmatmul.mubr.f32.gmra.mrb[0].mxu0 %v364
        %v495 = vpop.f32.mrb[0].mxu0
        %v496 = vadd.f32 0.0, %v495
        %v497 = vpop.f32.mrb[0].mxu0
        %v498 = vadd.f32 0.0, %v497
        %499 = vmatprep.mubr.f32.mxu0 0.0
        %500 = vmatmul.mubr.f32.gmra.mrb[0].mxu0 %v367
        %v501 = vpop.f32.mrb[0].mxu0
        %v502 = vadd.f32 0.0, %v501
        %v503 = vpop.f32.mrb[0].mxu0
        %v504 = vadd.f32 0.0, %v503
        %505 = vmatprep.mubr.f32.mxu0 0.0
        %506 = vmatmul.mubr.f32.gmra.mrb[0].mxu0 %v370
        %v507 = vpop.f32.mrb[0].mxu0
        %v508 = vadd.f32 0.0, %v507
        %v509 = vpop.f32.mrb[0].mxu0
        %v510 = vadd.f32 0.0, %v509
        %511 = vmatprep.mubr.f32.mxu0 0.0
        %512 = vmatmul.mubr.f32.gmra.mrb[0].mxu0 %v373
        %v513 = vpop.f32.mrb[0].mxu0
        %v514 = vadd.f32 0.0, %v513
        %v515 = vpop.f32.mrb[0].mxu0
        %v516 = vadd.f32 0.0, %v515
        %517 = vmatprep.mubr.f32.mxu0 0.0
        %518 = vmatmul.mubr.f32.gmra.mrb[0].mxu0 %v376
        %v519 = vpop.f32.mrb[0].mxu0
        %v520 = vadd.f32 0.0, %v519
        %v521 = vpop.f32.mrb[0].mxu0
        %v522 = vadd.f32 0.0, %v521
        %523 = vmatprep.mubr.f32.mxu0 0.0
        %524 = vmatmul.mubr.f32.gmra.mrb[0].mxu0 %v379
        %v525 = vpop.f32.mrb[0].mxu0
        %v526 = vadd.f32 0.0, %v525
        %v527 = vpop.f32.mrb[0].mxu0
        %v528 = vadd.f32 0.0, %v527
        %529 = vmatprep.mubr.f32.mxu0 0.0
        %530 = vmatmul.mubr.f32.gmra.mrb[0].mxu0 %v382
        %v531 = vpop.f32.mrb[0].mxu0
        %v532 = vadd.f32 0.0, %v531
        %v533 = vpop.f32.mrb[0].mxu0
        %v534 = vadd.f32 0.0, %v533
        %535 = vmatprep.mubr.f32.mxu0 0.0
        %536 = vmatmul.mubr.f32.gmra.mrb[0].mxu0 %v385
        %v537 = vpop.f32.mrb[0].mxu0
        %v538 = vadd.f32 0.0, %v537
        %v539 = vpop.f32.mrb[0].mxu0
        %v540 = vadd.f32 0.0, %v539
        %541 = vmatprep.mubr.f32.mxu0 0.0
        %542 = vmatmul.mubr.f32.gmra.mrb[0].mxu0 %v388
        %v543 = vpop.f32.mrb[0].mxu0
        %v544 = vadd.f32 0.0, %v543
        %v545 = vpop.f32.mrb[0].mxu0
        %v546 = vadd.f32 0.0, %v545
        %547 = vmatprep.mubr.f32.mxu0 0.0
        %548 = vmatmul.mubr.f32.gmra.mrb[0].mxu0 %v391
        %v549 = vpop.f32.mrb[0].mxu0
        %v550 = vadd.f32 0.0, %v549
        %v551 = vpop.f32.mrb[0].mxu0
        %v552 = vadd.f32 0.0, %v551
        %553 = vdwg.mxu0
        %v554 = vadd.f32 %v270, %v299
        %v555 = vadd.f32 %v279, %v299
        %v556 = vadd.f32 %v270, %v302
        %v557 = vadd.f32 %v279, %v302
        %v558 = vadd.f32 %v270, %v305
        %v559 = vadd.f32 %v279, %v305
        %v560 = vadd.f32 %v270, %v308
        %v561 = vadd.f32 %v279, %v308
        %v562 = vadd.f32 %v270, %v311
        %v563 = vadd.f32 %v279, %v311
        %v564 = vadd.f32 %v270, %v314
        %v565 = vadd.f32 %v279, %v314
        %v566 = vadd.f32 %v270, %v317
        %v567 = vadd.f32 %v279, %v317
        %v568 = vadd.f32 %v270, %v320
        %v569 = vadd.f32 %v279, %v320
        %v570 = vadd.f32 %v270, %v323
        %v571 = vadd.f32 %v279, %v323
        %v572 = vadd.f32 %v270, %v326
        %v573 = vadd.f32 %v279, %v326
        %v574 = vadd.f32 %v270, %v329
        %v575 = vadd.f32 %v279, %v329
        %v576 = vadd.f32 %v270, %v332
        %v577 = vadd.f32 %v279, %v332
        %v578 = vadd.f32 %v270, %v335
        %v579 = vadd.f32 %v279, %v335
        %v580 = vadd.f32 %v270, %v338
        %v581 = vadd.f32 %v279, %v338
        %v582 = vadd.f32 %v270, %v341
        %v583 = vadd.f32 %v279, %v341
        %v584 = vadd.f32 %v270, %v344
        %v585 = vadd.f32 %v279, %v344
        %v586 = vmul.f32 %v460, 2.0
        %v587 = vmul.f32 %v462, 2.0
        %v588 = vmul.f32 %v466, 2.0
        %v589 = vmul.f32 %v468, 2.0
        %v590 = vmul.f32 %v472, 2.0
        %v591 = vmul.f32 %v474, 2.0
        %v592 = vmul.f32 %v478, 2.0
        %v593 = vmul.f32 %v480, 2.0
        %v594 = vmul.f32 %v484, 2.0
        %v595 = vmul.f32 %v486, 2.0
        %v596 = vmul.f32 %v490, 2.0
        %v597 = vmul.f32 %v492, 2.0
        %v598 = vmul.f32 %v496, 2.0
        %v599 = vmul.f32 %v498, 2.0
        %v600 = vmul.f32 %v502, 2.0
        %v601 = vmul.f32 %v504, 2.0
        %v602 = vmul.f32 %v508, 2.0
        %v603 = vmul.f32 %v510, 2.0
        %v604 = vmul.f32 %v514, 2.0
        %v605 = vmul.f32 %v516, 2.0
        %v606 = vmul.f32 %v520, 2.0
        %v607 = vmul.f32 %v522, 2.0
        %v608 = vmul.f32 %v526, 2.0
        %v609 = vmul.f32 %v528, 2.0
        %v610 = vmul.f32 %v532, 2.0
        %v611 = vmul.f32 %v534, 2.0
        %v612 = vmul.f32 %v538, 2.0
        %v613 = vmul.f32 %v540, 2.0
        %v614 = vmul.f32 %v544, 2.0
        %v615 = vmul.f32 %v546, 2.0
        %v616 = vmul.f32 %v550, 2.0
        %v617 = vmul.f32 %v552, 2.0
        %v618 = vsub.f32 %v554, %v586
        %v619 = vsub.f32 %v555, %v587
        %v620 = vsub.f32 %v556, %v588
        %v621 = vsub.f32 %v557, %v589
        %v622 = vsub.f32 %v558, %v590
        %v623 = vsub.f32 %v559, %v591
        %v624 = vsub.f32 %v560, %v592
        %v625 = vsub.f32 %v561, %v593
        %v626 = vsub.f32 %v562, %v594
        %v627 = vsub.f32 %v563, %v595
        %v628 = vsub.f32 %v564, %v596
        %v629 = vsub.f32 %v565, %v597
        %v630 = vsub.f32 %v566, %v598
        %v631 = vsub.f32 %v567, %v599
        %v632 = vsub.f32 %v568, %v600
        %v633 = vsub.f32 %v569, %v601
        %v634 = vsub.f32 %v570, %v602
        %v635 = vsub.f32 %v571, %v603
        %v636 = vsub.f32 %v572, %v604
        %v637 = vsub.f32 %v573, %v605
        %v638 = vsub.f32 %v574, %v606
        %v639 = vsub.f32 %v575, %v607
        %v640 = vsub.f32 %v576, %v608
        %v641 = vsub.f32 %v577, %v609
        %v642 = vsub.f32 %v578, %v610
        %v643 = vsub.f32 %v579, %v611
        %v644 = vsub.f32 %v580, %v612
        %v645 = vsub.f32 %v581, %v613
        %v646 = vsub.f32 %v582, %v614
        %v647 = vsub.f32 %v583, %v615
        %v648 = vsub.f32 %v584, %v616
        %v649 = vsub.f32 %v585, %v617
        %v650 = vmin.f32 %v618, %v622
        %v651 = vmin.f32 %v620, %v624
        %v652 = vmin.f32 %v650, %v626
        %v653 = vmin.f32 %v651, %v628
        %v654 = vmin.f32 %v652, %v630
        %v655 = vmin.f32 %v653, %v632
        %v656 = vmin.f32 %v654, %v634
        %v657 = vmin.f32 %v655, %v636
        %v658 = vmin.f32 %v656, %v638
        %v659 = vmin.f32 %v657, %v640
        %v660 = vmin.f32 %v658, %v642
        %v661 = vmin.f32 %v659, %v644
        %v662 = vmin.f32 %v660, %v646
        %v663 = vmin.f32 %v661, %v648
        %v664 = vmin.f32 %v662, %v663
        %v665 = vrot.slane %v664, 4
        %v666 = vmin.f32 %v664, %v665
        %v667 = vrot.slane %v666, 2
        %v668 = vmin.f32 %v666, %v667
        %v669 = vrot.slane %v668, 1
        %v670 = vmin.f32 %v668, %v669
        %v671 = vmin.f32 %v619, %v623
        %v672 = vmin.f32 %v621, %v625
        %v673 = vmin.f32 %v671, %v627
        %v674 = vmin.f32 %v672, %v629
        %v675 = vmin.f32 %v673, %v631
        %v676 = vmin.f32 %v674, %v633
        %v677 = vmin.f32 %v675, %v635
        %v678 = vmin.f32 %v676, %v637
        %v679 = vmin.f32 %v677, %v639
        %v680 = vmin.f32 %v678, %v641
        %v681 = vmin.f32 %v679, %v643
        %v682 = vmin.f32 %v680, %v645
        %v683 = vmin.f32 %v681, %v647
        %v684 = vmin.f32 %v682, %v649
        %v685 = vmin.f32 %v683, %v684
        %v686 = vrot.slane %v685, 4
        %v687 = vmin.f32 %v685, %v686
        %v688 = vrot.slane %v687, 2
        %v689 = vmin.f32 %v687, %v688
        %v690 = vrot.slane %v689, 1
        %v691 = vmin.f32 %v689, %v690
        %v692 = vlaneseq
        %v693 = vshrl.u32 %v692, 7
        %v694 = vadd.s32 %v693, 8
        %v695 = vadd.s32 %v693, 16
        %v696 = vadd.s32 %v693, 24
        %v697 = vadd.s32 %v693, 32
        %v698 = vadd.s32 %v693, 40
        %v699 = vadd.s32 %v693, 48
        %v700 = vadd.s32 %v693, 56
        %v701 = vadd.s32 %v693, 64
        %v702 = vadd.s32 %v693, 72
        %v703 = vadd.s32 %v693, 80
        %v704 = vadd.s32 %v693, 88
        %v705 = vadd.s32 %v693, 96
        %v706 = vadd.s32 %v693, 104
        %v707 = vadd.s32 %v693, 112
        %v708 = vadd.s32 %v693, 120
        %v709 = vcvt.s32.f32 %v693
        %v710 = vcvt.s32.f32 %v694
        %v711 = vcvt.s32.f32 %v695
        %v712 = vcvt.s32.f32 %v696
        %v713 = vcvt.s32.f32 %v697
        %v714 = vcvt.s32.f32 %v698
        %v715 = vcvt.s32.f32 %v699
        %v716 = vcvt.s32.f32 %v700
        %v717 = vcvt.s32.f32 %v701
        %v718 = vcvt.s32.f32 %v702
        %v719 = vcvt.s32.f32 %v703
        %v720 = vcvt.s32.f32 %v704
        %v721 = vcvt.s32.f32 %v705
        %v722 = vcvt.s32.f32 %v706
        %v723 = vcvt.s32.f32 %v707
        %v724 = vcvt.s32.f32 %v708
        %vm725 = vcmp.eq.f32.partialorder %v618, %v670
        %vm726 = vcmp.eq.f32.partialorder %v619, %v691
        %vm727 = vcmp.eq.f32.partialorder %v620, %v670
        %vm728 = vcmp.eq.f32.partialorder %v621, %v691
        %vm729 = vcmp.eq.f32.partialorder %v622, %v670
        %vm730 = vcmp.eq.f32.partialorder %v623, %v691
        %vm731 = vcmp.eq.f32.partialorder %v624, %v670
        %vm732 = vcmp.eq.f32.partialorder %v625, %v691
        %vm733 = vcmp.eq.f32.partialorder %v626, %v670
        %vm734 = vcmp.eq.f32.partialorder %v627, %v691
        %vm735 = vcmp.eq.f32.partialorder %v628, %v670
        %vm736 = vcmp.eq.f32.partialorder %v629, %v691
        %vm737 = vcmp.eq.f32.partialorder %v630, %v670
        %vm738 = vcmp.eq.f32.partialorder %v631, %v691
        %vm739 = vcmp.eq.f32.partialorder %v632, %v670
        %vm740 = vcmp.eq.f32.partialorder %v633, %v691
        %vm741 = vcmp.eq.f32.partialorder %v634, %v670
        %vm742 = vcmp.eq.f32.partialorder %v635, %v691
        %vm743 = vcmp.eq.f32.partialorder %v636, %v670
        %vm744 = vcmp.eq.f32.partialorder %v637, %v691
        %vm745 = vcmp.eq.f32.partialorder %v638, %v670
        %vm746 = vcmp.eq.f32.partialorder %v639, %v691
        %vm747 = vcmp.eq.f32.partialorder %v640, %v670
        %vm748 = vcmp.eq.f32.partialorder %v641, %v691
        %vm749 = vcmp.eq.f32.partialorder %v642, %v670
        %vm750 = vcmp.eq.f32.partialorder %v643, %v691
        %vm751 = vcmp.eq.f32.partialorder %v644, %v670
        %vm752 = vcmp.eq.f32.partialorder %v645, %v691
        %vm753 = vcmp.eq.f32.partialorder %v646, %v670
        %vm754 = vcmp.eq.f32.partialorder %v647, %v691
        %vm755 = vcmp.eq.f32.partialorder %v648, %v670
        %vm756 = vcmp.eq.f32.partialorder %v649, %v691
        %v757 = vsel %vm725, %v709, 128.0
        %v758 = vsel %vm726, %v709, 128.0
        %v759 = vsel %vm727, %v710, 128.0
        %v760 = vsel %vm728, %v710, 128.0
        %v761 = vsel %vm729, %v711, 128.0
        %v762 = vsel %vm730, %v711, 128.0
        %v763 = vsel %vm731, %v712, 128.0
        %v764 = vsel %vm732, %v712, 128.0
        %v765 = vsel %vm733, %v713, 128.0
        %v766 = vsel %vm734, %v713, 128.0
        %v767 = vsel %vm735, %v714, 128.0
        %v768 = vsel %vm736, %v714, 128.0
        %v769 = vsel %vm737, %v715, 128.0
        %v770 = vsel %vm738, %v715, 128.0
        %v771 = vsel %vm739, %v716, 128.0
        %v772 = vsel %vm740, %v716, 128.0
        %v773 = vsel %vm741, %v717, 128.0
        %v774 = vsel %vm742, %v717, 128.0
        %v775 = vsel %vm743, %v718, 128.0
        %v776 = vsel %vm744, %v718, 128.0
        %v777 = vsel %vm745, %v719, 128.0
        %v778 = vsel %vm746, %v719, 128.0
        %v779 = vsel %vm747, %v720, 128.0
        %v780 = vsel %vm748, %v720, 128.0
        %v781 = vsel %vm749, %v721, 128.0
        %v782 = vsel %vm750, %v721, 128.0
        %v783 = vsel %vm751, %v722, 128.0
        %v784 = vsel %vm752, %v722, 128.0
        %v785 = vsel %vm753, %v723, 128.0
        %v786 = vsel %vm754, %v723, 128.0
        %v787 = vsel %vm755, %v724, 128.0
        %v788 = vsel %vm756, %v724, 128.0
        %v789 = vmin.f32 %v757, %v761
        %v790 = vmin.f32 %v759, %v763
        %v791 = vmin.f32 %v789, %v765
        %v792 = vmin.f32 %v790, %v767
        %v793 = vmin.f32 %v791, %v769
        %v794 = vmin.f32 %v792, %v771
        %v795 = vmin.f32 %v793, %v773
        %v796 = vmin.f32 %v794, %v775
        %v797 = vmin.f32 %v795, %v777
        %v798 = vmin.f32 %v796, %v779
        %v799 = vmin.f32 %v797, %v781
        %v800 = vmin.f32 %v798, %v783
        %v801 = vmin.f32 %v799, %v785
        %v802 = vmin.f32 %v800, %v787
        %v803 = vmin.f32 %v801, %v802
        %v804 = vrot.slane %v803, 4
        %v805 = vmin.f32 %v803, %v804
        %v806 = vrot.slane %v805, 2
        %v807 = vmin.f32 %v805, %v806
        %v808 = vrot.slane %v807, 1
        %v809 = vmin.f32 %v807, %v808
        %v810 = vmin.f32 %v758, %v762
        %v811 = vmin.f32 %v760, %v764
        %v812 = vmin.f32 %v810, %v766
        %v813 = vmin.f32 %v811, %v768
        %v814 = vmin.f32 %v812, %v770
        %v815 = vmin.f32 %v813, %v772
        %v816 = vmin.f32 %v814, %v774
        %v817 = vmin.f32 %v815, %v776
        %v818 = vmin.f32 %v816, %v778
        %v819 = vmin.f32 %v817, %v780
        %v820 = vmin.f32 %v818, %v782
        %v821 = vmin.f32 %v819, %v784
        %v822 = vmin.f32 %v820, %v786
        %v823 = vmin.f32 %v821, %v788
        %v824 = vmin.f32 %v822, %v823
        %v825 = vrot.slane %v824, 4
        %v826 = vmin.f32 %v824, %v825
        %v827 = vrot.slane %v826, 2
        %v828 = vmin.f32 %v826, %v827
        %v829 = vrot.slane %v828, 1
        %v830 = vmin.f32 %v828, %v829
        %vm831 = vcmp.eq.f32.partialorder %v709, %v809
        %vm832 = vcmp.eq.f32.partialorder %v709, %v830
        %vm833 = vcmp.eq.f32.partialorder %v710, %v809
        %vm834 = vcmp.eq.f32.partialorder %v710, %v830
        %vm835 = vcmp.eq.f32.partialorder %v711, %v809
        %vm836 = vcmp.eq.f32.partialorder %v711, %v830
        %vm837 = vcmp.eq.f32.partialorder %v712, %v809
        %vm838 = vcmp.eq.f32.partialorder %v712, %v830
        %vm839 = vcmp.eq.f32.partialorder %v713, %v809
        %vm840 = vcmp.eq.f32.partialorder %v713, %v830
        %vm841 = vcmp.eq.f32.partialorder %v714, %v809
        %vm842 = vcmp.eq.f32.partialorder %v714, %v830
        %vm843 = vcmp.eq.f32.partialorder %v715, %v809
        %vm844 = vcmp.eq.f32.partialorder %v715, %v830
        %vm845 = vcmp.eq.f32.partialorder %v716, %v809
        %vm846 = vcmp.eq.f32.partialorder %v716, %v830
        %vm847 = vcmp.eq.f32.partialorder %v717, %v809
        %vm848 = vcmp.eq.f32.partialorder %v717, %v830
        %vm849 = vcmp.eq.f32.partialorder %v718, %v809
        %vm850 = vcmp.eq.f32.partialorder %v718, %v830
        %vm851 = vcmp.eq.f32.partialorder %v719, %v809
        %vm852 = vcmp.eq.f32.partialorder %v719, %v830
        %vm853 = vcmp.eq.f32.partialorder %v720, %v809
        %vm854 = vcmp.eq.f32.partialorder %v720, %v830
        %vm855 = vcmp.eq.f32.partialorder %v721, %v809
        %vm856 = vcmp.eq.f32.partialorder %v721, %v830
        %vm857 = vcmp.eq.f32.partialorder %v722, %v809
        %vm858 = vcmp.eq.f32.partialorder %v722, %v830
        %vm859 = vcmp.eq.f32.partialorder %v723, %v809
        %vm860 = vcmp.eq.f32.partialorder %v723, %v830
        %vm861 = vcmp.eq.f32.partialorder %v724, %v809
        %vm862 = vcmp.eq.f32.partialorder %v724, %v830
        %v863 = vsel %vm831, 1, 0
        %v864 = vsel %vm832, 1, 0
        %v865 = vsel %vm833, 1, 0
        %v866 = vsel %vm834, 1, 0
        %v867 = vsel %vm835, 1, 0
        %v868 = vsel %vm836, 1, 0
        %v869 = vsel %vm837, 1, 0
        %v870 = vsel %vm838, 1, 0
        %v871 = vsel %vm839, 1, 0
        %v872 = vsel %vm840, 1, 0
        %v873 = vsel %vm841, 1, 0
        %v874 = vsel %vm842, 1, 0
        %v875 = vsel %vm843, 1, 0
        %v876 = vsel %vm844, 1, 0
        %v877 = vsel %vm845, 1, 0
        %v878 = vsel %vm846, 1, 0
        %v879 = vsel %vm847, 1, 0
        %v880 = vsel %vm848, 1, 0
        %v881 = vsel %vm849, 1, 0
        %v882 = vsel %vm850, 1, 0
        %v883 = vsel %vm851, 1, 0
        %v884 = vsel %vm852, 1, 0
        %v885 = vsel %vm853, 1, 0
        %v886 = vsel %vm854, 1, 0
        %v887 = vsel %vm855, 1, 0
        %v888 = vsel %vm856, 1, 0
        %v889 = vsel %vm857, 1, 0
        %v890 = vsel %vm858, 1, 0
        %v891 = vsel %vm859, 1, 0
        %v892 = vsel %vm860, 1, 0
        %v893 = vsel %vm861, 1, 0
        %v894 = vsel %vm862, 1, 0
        %v895 = vcvt.s32.f32 %v863
        %v896 = vcvt.s32.f32 %v864
        %v897 = vcvt.s32.f32 %v865
        %v898 = vcvt.s32.f32 %v866
        %v899 = vcvt.s32.f32 %v867
        %v900 = vcvt.s32.f32 %v868
        %v901 = vcvt.s32.f32 %v869
        %v902 = vcvt.s32.f32 %v870
        %v903 = vcvt.s32.f32 %v871
        %v904 = vcvt.s32.f32 %v872
        %v905 = vcvt.s32.f32 %v873
        %v906 = vcvt.s32.f32 %v874
        %v907 = vcvt.s32.f32 %v875
        %v908 = vcvt.s32.f32 %v876
        %v909 = vcvt.s32.f32 %v877
        %v910 = vcvt.s32.f32 %v878
        %v911 = vcvt.s32.f32 %v879
        %v912 = vcvt.s32.f32 %v880
        %v913 = vcvt.s32.f32 %v881
        %v914 = vcvt.s32.f32 %v882
        %v915 = vcvt.s32.f32 %v883
        %v916 = vcvt.s32.f32 %v884
        %v917 = vcvt.s32.f32 %v885
        %v918 = vcvt.s32.f32 %v886
        %v919 = vcvt.s32.f32 %v887
        %v920 = vcvt.s32.f32 %v888
        %v921 = vcvt.s32.f32 %v889
        %v922 = vcvt.s32.f32 %v890
        %v923 = vcvt.s32.f32 %v891
        %v924 = vcvt.s32.f32 %v892
        %v925 = vcvt.s32.f32 %v893
        %v926 = vcvt.s32.f32 %v894
        %927 = vxpose.xlu0.b32.start [1/16] %v238, 128
        %928 = vxpose.xlu0.b32.cont [2/16] %v239, 128
        %929 = vxpose.xlu0.b32.cont [3/16] %v240, 128
        %930 = vxpose.xlu0.b32.cont [4/16] %v241, 128
        %931 = vxpose.xlu0.b32.cont [5/16] %v242, 128
        %932 = vxpose.xlu0.b32.cont [6/16] %v243, 128
        %933 = vxpose.xlu0.b32.cont [7/16] %v244, 128
        %934 = vxpose.xlu0.b32.cont [8/16] %v245, 128
        %935 = vxpose.xlu0.b32.cont [9/16] %v246, 128
        %936 = vxpose.xlu0.b32.cont [10/16] %v247, 128
        %937 = vxpose.xlu0.b32.cont [11/16] %v248, 128
        %938 = vxpose.xlu0.b32.cont [12/16] %v249, 128
        %939 = vxpose.xlu0.b32.cont [13/16] %v250, 128
        %940 = vxpose.xlu0.b32.cont [14/16] %v251, 128
        %941 = vxpose.xlu0.b32.cont [15/16] %v252, 128
        %942 = vxpose.xlu0.b32.end [16/16] %v253, 128
        %v943 = vpop.trf.xlu0
        %v944 = vpop.trf.xlu0
        %v945 = vpop.trf.xlu0
        %v946 = vpop.trf.xlu0
        %v947 = vpop.trf.xlu0
        %v948 = vpop.trf.xlu0
        %v949 = vpop.trf.xlu0
        %v950 = vpop.trf.xlu0
        %v951 = vpop.trf.xlu0
        %v952 = vpop.trf.xlu0
        %v953 = vpop.trf.xlu0
        %v954 = vpop.trf.xlu0
        %v955 = vpop.trf.xlu0
        %v956 = vpop.trf.xlu0
        %v957 = vpop.trf.xlu0
        %v958 = vpop.trf.xlu0
        %959 = vmatprep.subr.mxu0 %v896
        %960 = vmatpush1.msra.mxu0 %v895
        %961 = vmatprep.subr.mxu0 %v898
        %962 = vmatpush1.msra.mxu0 %v897
        %963 = vmatprep.subr.mxu0 %v900
        %964 = vmatpush1.msra.mxu0 %v899
        %965 = vmatprep.subr.mxu0 %v902
        %966 = vmatpush1.msra.mxu0 %v901
        %967 = vmatprep.subr.mxu0 %v904
        %968 = vmatpush1.msra.mxu0 %v903
        %969 = vmatprep.subr.mxu0 %v906
        %970 = vmatpush1.msra.mxu0 %v905
        %971 = vmatprep.subr.mxu0 %v908
        %972 = vmatpush1.msra.mxu0 %v907
        %973 = vmatprep.subr.mxu0 %v910
        %974 = vmatpush1.msra.mxu0 %v909
        %975 = vmatprep.subr.mxu0 %v912
        %976 = vmatpush1.msra.mxu0 %v911
        %977 = vmatprep.subr.mxu0 %v914
        %978 = vmatpush1.msra.mxu0 %v913
        %979 = vmatprep.subr.mxu0 %v916
        %980 = vmatpush1.msra.mxu0 %v915
        %981 = vmatprep.subr.mxu0 %v918
        %982 = vmatpush1.msra.mxu0 %v917
        %983 = vmatprep.subr.mxu0 %v920
        %984 = vmatpush1.msra.mxu0 %v919
        %985 = vmatprep.subr.mxu0 %v922
        %986 = vmatpush1.msra.mxu0 %v921
        %987 = vmatprep.subr.mxu0 %v924
        %988 = vmatpush1.msra.mxu0 %v923
        %989 = vmatprep.subr.mxu0 %v926
        %990 = vmatpush1.msra.mxu0 %v925
        %991 = vmatprep.subr.mxu0 0.0
        %992 = vmatpush1.msra.mxu0 0.0
        %993 = vmatprep.subr.mxu0 0.0
        %994 = vmatpush1.msra.mxu0 0.0
        %995 = vmatprep.subr.mxu0 0.0
        %996 = vmatpush1.msra.mxu0 0.0
        %997 = vmatprep.subr.mxu0 0.0
        %998 = vmatpush1.msra.mxu0 0.0
        %999 = vmatprep.subr.mxu0 0.0
        %1000 = vmatpush1.msra.mxu0 0.0
        %1001 = vmatprep.subr.mxu0 0.0
        %1002 = vmatpush1.msra.mxu0 0.0
        %1003 = vmatprep.subr.mxu0 0.0
        %1004 = vmatpush1.msra.mxu0 0.0
        %1005 = vmatprep.subr.mxu0 0.0
        %1006 = vmatpush1.msra.mxu0 0.0
        %1007 = vmatprep.subr.mxu0 0.0
        %1008 = vmatpush1.msra.mxu0 0.0
        %1009 = vmatprep.subr.mxu0 0.0
        %1010 = vmatpush1.msra.mxu0 0.0
        %1011 = vmatprep.subr.mxu0 0.0
        %1012 = vmatpush1.msra.mxu0 0.0
        %1013 = vmatprep.subr.mxu0 0.0
        %1014 = vmatpush1.msra.mxu0 0.0
        %1015 = vmatprep.subr.mxu0 0.0
        %1016 = vmatpush1.msra.mxu0 0.0
        %1017 = vmatprep.subr.mxu0 0.0
        %1018 = vmatpush1.msra.mxu0 0.0
        %1019 = vmatprep.subr.mxu0 0.0
        %1020 = vmatpush1.msra.mxu0 0.0
        %1021 = vmatprep.subr.mxu0 0.0
        %1022 = vmatpush1.msra.mxu0 0.0
        %1023 = vmatprep.mubr.f32.mxu0 0.0
        %1024 = vmatmul.mubr.f32.gmra.mrb[0].mxu0 %v943
        %v1025 = vpop.f32.mrb[0].mxu0
        %v1026 = vadd.f32 0.0, %v1025
        %v1027 = vpop.f32.mrb[0].mxu0
        %v1028 = vadd.f32 0.0, %v1027
        %1029 = vmatprep.mubr.f32.mxu0 0.0
        %1030 = vmatmul.mubr.f32.gmra.mrb[0].mxu0 %v944
        %v1031 = vpop.f32.mrb[0].mxu0
        %v1032 = vadd.f32 0.0, %v1031
        %v1033 = vpop.f32.mrb[0].mxu0
        %v1034 = vadd.f32 0.0, %v1033
        %1035 = vmatprep.mubr.f32.mxu0 0.0
        %1036 = vmatmul.mubr.f32.gmra.mrb[0].mxu0 %v945
        %v1037 = vpop.f32.mrb[0].mxu0
        %v1038 = vadd.f32 0.0, %v1037
        %v1039 = vpop.f32.mrb[0].mxu0
        %v1040 = vadd.f32 0.0, %v1039
        %1041 = vmatprep.mubr.f32.mxu0 0.0
        %1042 = vmatmul.mubr.f32.gmra.mrb[0].mxu0 %v946
        %v1043 = vpop.f32.mrb[0].mxu0
        %v1044 = vadd.f32 0.0, %v1043
        %v1045 = vpop.f32.mrb[0].mxu0
        %v1046 = vadd.f32 0.0, %v1045
        %1047 = vdwg.mxu0
        %1048 = vst [vmem:[%s209] sm:$0xff] %v1026
        %1049 = vst [vmem:[%s209 + $0x8] sm:$0xff] %v1028
        %1050 = vst [vmem:[%s209 + $0x10] sm:$0xff] %v1032
        %1051 = vst [vmem:[%s209 + $0x18] sm:$0xff] %v1034
        %1052 = vst [vmem:[%s209 + $0x20] sm:$0xff] %v1038
        %1053 = vst [vmem:[%s209 + $0x28] sm:$0xff] %v1040
        %1054 = vst [vmem:[%s209 + $0x30] sm:$0xff] %v1044
        %1055 = vst [vmem:[%s209 + $0x38] sm:$0xff] %v1046
        %v1056 = vsub.f32 %v1026, %v230
        %v1057 = vsub.f32 %v1028, %v231
        %v1058 = vsub.f32 %v1032, %v232
        %v1059 = vsub.f32 %v1034, %v233
        %v1060 = vsub.f32 %v1038, %v234
        %v1061 = vsub.f32 %v1040, %v235
        %v1062 = vsub.f32 %v1044, %v236
        %v1063 = vsub.f32 %v1046, %v237
        %v1064 = vmul.f32 %v1056, %v1056
        %v1065 = vmul.f32 %v1057, %v1057
        %v1066 = vmul.f32 %v1058, %v1058
        %v1067 = vmul.f32 %v1059, %v1059
        %v1068 = vmul.f32 %v1060, %v1060
        %v1069 = vmul.f32 %v1061, %v1061
        %v1070 = vmul.f32 %v1062, %v1062
        %v1071 = vmul.f32 %v1063, %v1063
        %v1072 = vadd.f32 %v1064, %v1066
        %v1073 = vadd.f32 %v1072, %v1068
        %v1074 = vadd.f32 %v1073, %v1070
        %v1075 = vrot.slane %v1074, 4
        %v1076 = vadd.f32 %v1074, %v1075
        %v1077 = vrot.slane %v1076, 2
        %v1078 = vadd.f32 %v1076, %v1077
        %v1079 = vrot.slane %v1078, 1
        %v1080 = vadd.f32 %v1078, %v1079
        %v1081 = vadd.f32 %v1065, %v1067
        %v1082 = vadd.f32 %v1081, %v1069
        %v1083 = vadd.f32 %v1082, %v1071
        %v1084 = vrot.slane %v1083, 4
        %v1085 = vadd.f32 %v1083, %v1084
        %v1086 = vrot.slane %v1085, 2
        %v1087 = vadd.f32 %v1085, %v1086
        %v1088 = vrot.slane %v1087, 1
        %v1089 = vadd.f32 %v1087, %v1088
        %v1090 = vadd.f32 %v1080, %v1089
        %1091 = vadd.xlane.f32.xlu0 %v1090
        %v1092 = vpop.xlane.xlu0 %1091
        %1093 = vst [vmem:[%s229] sm:$0xff] %v1092
        %s1094 = sand.u32 %s92, 1
        %s1095 = scalar_lea.sflag [#allocation4], %s1094
        %s1096 = sand.u32 %s92, 1
        %s1097 = smul.addr %s1096, 64
        %s1098 = scalar_lea.vmem [#allocation5], %s1097
        %p1099 = scmp.lt.s32.totalorder %s25, 1
        %s1100 = scalar_select %p1099, %s25, 1
        %p1101 = scmp.lt.s32.totalorder %s26, 1
        %s1102 = scalar_select %p1101, %s26, 1
        %s1103 = smul.addr %s1100, 2
        %s1104 = sadd.s32 %s1102, %s1103
        %s1105 = smul.addr %s1104, 8
        %s1106 = scalar_lea.vmem %s3, %s1105
        // Predicated region
        $region33: #{vector_quantizer_forward.1} parent=27 // pred_check
          %p1107 = pneg %p102
        $region34: #{vector_quantizer_forward.1} parent=27 // pred_check_branch
          %1109 = sbr.rel (%p1107) target = $region36
        $region35: #{vector_quantizer_forward.1} parent=27 // pred_region
          %s1110 = smul.u32 2, %s26
          %s1112 = ssub.s32 1024, 1024
          %1113 = vsyncadd %s1095, %s1112
          %s1114 = smul.addr %s25, 16
          %s1115 = sadd.s32 %s1110, %s1114
          %s1116 = smul.addr %s1115, 128
          %s1117 = scalar_lea.hbm %s2, %s1116
          %s1118 = sshll.u32 %s1098, 4
          %s1119 = int_to_ptr.vmem [resolvable:$true] %s1118
          %1124 = dma.vmem_to_hbm [thread:$0]  %s1119, 1024, %s1117, %s1095, 256, 512, 16
        $region36: #{vector_quantizer_forward.1} parent=27 // pred_fallthru
          _
        // Predicated region
        $region37: #{vector_quantizer_forward.1} parent=27 // pred_check
          %p1125 = pneg %p130
        $region38: #{vector_quantizer_forward.1} parent=27 // pred_check_branch
          %1127 = sbr.rel (%p1125) target = $region40
        $region39: #{vector_quantizer_forward.1} parent=27 // pred_region
          _
        $region40: #{vector_quantizer_forward.1} parent=27 // pred_fallthru
          _
      $region28: #{vector_quantizer_forward.1} parent=5 // pred_fallthru
        _
      %p1128 = scmp.le.s32.totalorder 2, %s16
      // Predicated region
      $region41: #{vector_quantizer_forward.1} parent=5 // pred_check
        %p1129 = pneg %p1128
      $region42: #{vector_quantizer_forward.1} parent=5 // pred_check_branch
        %1131 = sbr.rel (%p1129) target = $region44
      $region43: #{vector_quantizer_forward.1} parent=5 // pred_region
        %s1132 = ssub.s32 %s16, 2
        // Predicated region
        $region45: #{vector_quantizer_forward.1} parent=43 // pred_check
          %p1133 = pneg %p108
        $region46: #{vector_quantizer_forward.1} parent=43 // pred_check_branch
          %1135 = sbr.rel (%p1133) target = $region48
        $region47: #{vector_quantizer_forward.1} parent=43 // pred_region
          %s1136 = sand.u32 %s93, 1
          %s1137 = scalar_lea.sflag [#allocation4], %s1136
          %s1138 = sand.u32 %s93, 1
          %s1139 = smul.addr %s1138, 64
          %s1140 = scalar_lea.vmem [#allocation5], %s1139
          %1141 = dma.done %s1137, 1024
        $region48: #{vector_quantizer_forward.1} parent=43 // pred_fallthru
          _
        // Predicated region
        $region49: #{vector_quantizer_forward.1} parent=43 // pred_check
          %p1142 = pneg %p136
        $region50: #{vector_quantizer_forward.1} parent=43 // pred_check_branch
          %1144 = sbr.rel (%p1142) target = $region52
        $region51: #{vector_quantizer_forward.1} parent=43 // pred_region
          %p1145 = scmp.lt.s32.totalorder %s27, 1
          %s1146 = scalar_select %p1145, %s27, 1
          %p1147 = scmp.lt.s32.totalorder %s28, 1
          %s1148 = scalar_select %p1147, %s28, 1
          %s1149 = smul.addr %s1146, 2
          %s1150 = sadd.s32 %s1148, %s1149
          %s1151 = smul.addr %s1150, 8
          %s1152 = scalar_lea.vmem %s3, %s1151
        $region52: #{vector_quantizer_forward.1} parent=43 // pred_fallthru
          _
      $region44: #{vector_quantizer_forward.1} parent=5 // pred_fallthru
        _
    $region6: #{vector_quantizer_forward.1} parent=1 // loop_footer
      %s20 = sadd.s32 1, %s16
    $region7: #{vector_quantizer_forward.1} parent=1 // loop_footer_branch
      %15 = sbr.rel target = $region3
    $region8: #{vector_quantizer_forward.1} parent=1 // loop_exit
      _
    %1153 = vsyncpa [#allocation3], 1
    %s1154 = scalar_lea.sflag [#allocation3], 1
    %1155 = vsyncpa %s1154, 1
    %1156 = vsyncpa [#allocation4], 1
    %s1157 = scalar_lea.sflag [#allocation4], 1
    %1158 = vsyncpa %s1157, 1

</llo_original>
